<compile_context>
chip_gen: v7x
topology: tpu7x:2x2x1
jax: 0.10.0
libtpu: 0.0.40
codegen_flags: <defaults>
</compile_context>

<pallas_src>
import functools

import jax
import jax.numpy as jnp
from jax.experimental import pallas as pl
from jax.experimental.pallas import tpu as pltpu


# ---------------------------------------------------------------------------
# Kernels
# ---------------------------------------------------------------------------

def _sdpa_kernel_nomask(q_ref, k_ref, v_ref, out_ref, attn_ref, *,
                        inv_temperature, approx_recip):
    # Blocks: q (bt, tq, D), k (bt, Lk, D), v (bt, Lk, Dv),
    #         out (bt, tq, Dv), attn (bt, tq, Lk).
    q = q_ref[...] * inv_temperature          # fold temperature into q (Lq*D mults)
    k = k_ref[...]
    v = v_ref[...]

    # scores = (q / temperature) @ k^T : contract the last axes, no K transpose.
    scores = jnp.einsum("bqd,bkd->bqk", q, k, preferred_element_type=jnp.float32)

    # softmax over the key axis (dim=2 in the PyTorch module)
    scores = scores - jnp.max(scores, axis=-1, keepdims=True)
    p = jnp.exp(scores)
    p = p * pl.reciprocal(jnp.sum(p, axis=-1, keepdims=True), approx=approx_recip)

    if attn_ref.dtype == v_ref.dtype:
        p_cast = p.astype(attn_ref.dtype)     # single cast pass, reused below
        attn_ref[...] = p_cast
        out_ref[...] = jnp.einsum(
            "bqk,bkd->bqd", p_cast, v, preferred_element_type=jnp.float32
        ).astype(out_ref.dtype)
    else:
        attn_ref[...] = p.astype(attn_ref.dtype)
        out_ref[...] = jnp.einsum(
            "bqk,bkd->bqd", p.astype(v_ref.dtype), v,
            preferred_element_type=jnp.float32,
        ).astype(out_ref.dtype)


def _sdpa_kernel_masked(q_ref, k_ref, v_ref, mask_ref, out_ref, attn_ref, *,
                        inv_temperature, approx_recip):
    q = q_ref[...] * inv_temperature
    k = k_ref[...]
    v = v_ref[...]
    mask = mask_ref[...]                      # int8, nonzero == masked
                                              # shape (1|bt, tq, Lk) -> broadcasts

    scores = jnp.einsum("bqd,bkd->bqk", q, k, preferred_element_type=jnp.float32)
    scores = jnp.where(mask != 0, jnp.float32(-10000000000.0), scores)

    scores = scores - jnp.max(scores, axis=-1, keepdims=True)
    p = jnp.exp(scores)
    p = p * pl.reciprocal(jnp.sum(p, axis=-1, keepdims=True), approx=approx_recip)

    if attn_ref.dtype == v_ref.dtype:
        p_cast = p.astype(attn_ref.dtype)
        attn_ref[...] = p_cast
        out_ref[...] = jnp.einsum(
            "bqk,bkd->bqd", p_cast, v, preferred_element_type=jnp.float32
        ).astype(out_ref.dtype)
    else:
        attn_ref[...] = p.astype(attn_ref.dtype)
        out_ref[...] = jnp.einsum(
            "bqk,bkd->bqd", p.astype(v_ref.dtype), v,
            preferred_element_type=jnp.float32,
        ).astype(out_ref.dtype)


# ---------------------------------------------------------------------------
# Tile / VMEM heuristics
# ---------------------------------------------------------------------------

def _round_up(x, m):
    return ((x + m - 1) // m) * m


def _vmem_limit_bytes():
    """Generation-aware VMEM limit: ~3/4 of physical, capped at 100 MiB.
    v5e/v6e (128 MiB) -> 96 MiB, v7x (64 MiB) -> 48 MiB."""
    cap = 64 * 1024 * 1024  # conservative fallback (v7x physical VMEM)
    try:
        info = pltpu.get_tpu_info()
        cap = int(getattr(info, "vmem_capacity_bytes", cap))
    except Exception:
        pass
    return max(32 * 1024 * 1024, min((cap * 3) // 4, 100 * 1024 * 1024))


def _footprint_bytes(bt, tq, Lk, D, Dv, in_sz, out_sz, attn_sz, mask_bt):
    q_b = 2 * bt * tq * D * in_sz              # double-buffered q tile
    kv_b = 2 * bt * Lk * (D + Dv) * in_sz      # double-buffered K + V (resident over qi)
    o_b = 2 * bt * tq * Dv * out_sz            # double-buffered output tile
    a_b = 2 * bt * tq * Lk * attn_sz           # double-buffered attn tile
    s_b = 2 * bt * tq * Lk * 4                 # f32 scores / exp temporaries
    m_b = 2 * mask_bt * tq * Lk                # int8 mask tile (0 if no mask)
    return q_b + kv_b + o_b + a_b + s_b + m_b


def _pick_tiles(B, Lq, Lk, D, Dv, in_sz, out_sz, attn_sz, mask_mode, budget):
    """Choose (bt, tq): MXU-friendly tq (target 256), pack batches for tiny Lq."""
    def fp(bt_, tq_):
        m_bt = 0 if mask_mode == "none" else (1 if mask_mode == "shared" else bt_)
        return _footprint_bytes(bt_, tq_, Lk, D, Dv, in_sz, out_sz, attn_sz, m_bt)

    tq = min(_round_up(max(Lq, 1), 8), 256)
    while tq > 8 and fp(1, tq) > budget:
        tq = max(8, ((tq // 2) // 8) * 8)

    bt = 1
    if tq >= Lq:
        # whole query length in one tile: pack batches to amortize per-step overhead
        while bt < B and fp(bt + 1, tq) <= budget:
            bt += 1
        while bt > 1 and B % bt != 0:          # avoid padded edge batch blocks
            bt -= 1
    return bt, tq


# ---------------------------------------------------------------------------
# Wrapper
# ---------------------------------------------------------------------------

def scaled_dot_product_attention(q, k, v, temperature, mask=None, attn_dtype=None):
    """q: (B, Lq, D), k: (B, Lk, D), v: (B, Lk, Dv).
    mask: optional bool of shape (Lq, Lk), (1, Lq, Lk) or (B, Lq, Lk); True == masked.
    attn_dtype: optional dtype for the returned attention matrix (e.g. jnp.bfloat16
    to halve the dominant attn writeback traffic); defaults to q.dtype."""
    B, Lq, D = q.shape
    _, Lk, Dk = k.shape
    _, _, Dv = v.shape
    assert D == Dk and k.shape[0] == B and v.shape[0] == B and v.shape[1] == Lk

    inv_temperature = 1.0 / float(temperature)
    out_dtype = q.dtype
    attn_dtype = out_dtype if attn_dtype is None else jnp.dtype(attn_dtype)
    # Exact reciprocal for f32 (reference-level accuracy); EUP approx otherwise.
    approx_recip = q.dtype != jnp.float32

    mask_arr = None
    mask_mode = "none"
    if mask is not None:
        mask_arr = jnp.asarray(mask)
        if mask_arr.ndim == 2:
            mask_arr = mask_arr[None]
        assert mask_arr.ndim == 3 and mask_arr.shape[1:] == (Lq, Lk)
        assert mask_arr.shape[0] in (1, B)
        mask_mode = "shared" if mask_arr.shape[0] == 1 else "per_batch"
        mask_arr = mask_arr.astype(jnp.int8)   # 4x smaller DMA than int32

    vmem_limit = _vmem_limit_bytes()
    budget = (vmem_limit * 4) // 5             # headroom for compiler scratch
    bt, tq = _pick_tiles(B, Lq, Lk, D, Dv, q.dtype.itemsize, jnp.dtype(out_dtype).itemsize,
                         attn_dtype.itemsize, mask_mode, budget)

    grid_b = pl.cdiv(B, bt)
    grid_q = pl.cdiv(Lq, tq)
    grid = (grid_b, grid_q)

    # q / out / attn tiles move with (bi, qi); K / V block indices ignore qi so the
    # K/V tiles stay resident across the inner Lq axis (no redundant DMAs).
    q_spec = pl.BlockSpec((bt, tq, D), lambda bi, qi: (bi, qi, 0))
    k_spec = pl.BlockSpec((bt, Lk, D), lambda bi, qi: (bi, 0, 0))
    v_spec = pl.BlockSpec((bt, Lk, Dv), lambda bi, qi: (bi, 0, 0))
    out_spec = pl.BlockSpec((bt, tq, Dv), lambda bi, qi: (bi, qi, 0))
    attn_spec = pl.BlockSpec((bt, tq, Lk), lambda bi, qi: (bi, qi, 0))

    out_shape = (
        jax.ShapeDtypeStruct((B, Lq, Dv), out_dtype),
        jax.ShapeDtypeStruct((B, Lq, Lk), attn_dtype),
    )

    # Keep the megacore split on the batch axis when it has >=2 tiles so K/V HBM
    # reads stay disjoint across cores; otherwise allow the split on qi.
    if grid_b >= 2:
        dims = ("parallel", "arbitrary")
    else:
        dims = ("arbitrary", "parallel")
    compiler_params = pltpu.CompilerParams(
        dimension_semantics=dims,
        vmem_limit_bytes=vmem_limit,
    )

    if mask_arr is None:
        # Specialized kernel: no mask operand at all (no zero-mask DMA).
        kernel = functools.partial(
            _sdpa_kernel_nomask,
            inv_temperature=inv_temperature, approx_recip=approx_recip)
        out, attn = pl.pallas_call(
            kernel,
            out_shape=out_shape,
            grid_spec=pltpu.PrefetchScalarGridSpec(
                num_scalar_prefetch=0,
                grid=grid,
                in_specs=[q_spec, k_spec, v_spec],
                out_specs=[out_spec, attn_spec],
            ),
            compiler_params=compiler_params,
        )(q, k, v)
    else:
        if mask_mode == "shared":
            # One (1, Lq, Lk) mask shared by all batches: index_map ignores bi, so
            # mask HBM traffic is 1/B of a batch-broadcast mask; jnp.where
            # broadcasts over the bt axis in-kernel.
            mask_spec = pl.BlockSpec((1, tq, Lk), lambda bi, qi: (0, qi, 0))
        else:
            mask_spec = pl.BlockSpec((bt, tq, Lk), lambda bi, qi: (bi, qi, 0))
        kernel = functools.partial(
            _sdpa_kernel_masked,
            inv_temperature=inv_temperature, approx_recip=approx_recip)
        out, attn = pl.pallas_call(
            kernel,
            out_shape=out_shape,
            grid_spec=pltpu.PrefetchScalarGridSpec(
                num_scalar_prefetch=0,
                grid=grid,
                in_specs=[q_spec, k_spec, v_spec, mask_spec],
                out_specs=[out_spec, attn_spec],
            ),
            compiler_params=compiler_params,
        )(q, k, v, mask_arr)
    return out, attn


# ---------------------------------------------------------------------------
# Reference + test
# ---------------------------------------------------------------------------

def _reference(q, k, v, temperature, mask=None):
    attn = jnp.einsum("bqd,bkd->bqk", q, k) / temperature
    if mask is not None:
        m = mask if mask.ndim == 3 else mask[None]
        attn = jnp.where(m, -10000000000.0, attn)
    attn = jax.nn.softmax(attn, axis=2)
    out = jnp.einsum("bqk,bkd->bqd", attn, v)
    return out, attn


if __name__ == "__main__":
    key = jax.random.PRNGKey(0)
    kq, kk, kv = jax.random.split(key, 3)

    B, Lq, Lk, D, Dv = 2, 8, 8, 32, 32
    temperature = float(D) ** 0.5

    q = jax.random.normal(kq, (B, Lq, D), dtype=jnp.float32)
    k = jax.random.normal(kk, (B, Lk, D), dtype=jnp.float32)
    v = jax.random.normal(kv, (B, Lk, Dv), dtype=jnp.float32)

    # --- no-mask path (mask operand dropped entirely) ---
    out, attn = scaled_dot_product_attention(q, k, v, temperature, mask=None)
    out = jax.block_until_ready(out)
    attn = jax.block_until_ready(attn)
    out_ref, attn_ref = _reference(q, k, v, temperature, mask=None)
    assert jnp.allclose(out, out_ref, atol=1e-5, rtol=1e-5)
    assert jnp.allclose(attn, attn_ref, atol=1e-5, rtol=1e-5)

    # --- shared (Lq, Lk) causal mask: wrapper does NOT broadcast over batch ---
    causal = jnp.triu(jnp.ones((Lq, Lk), dtype=bool), k=1)
    out_m, attn_m = scaled_dot_product_attention(q, k, v, temperature, mask=causal)
    out_m = jax.block_until_ready(out_m)
    attn_m = jax.block_until_ready(attn_m)
    out_mref, attn_mref = _reference(q, k, v, temperature, mask=causal)
    assert jnp.allclose(out_m, out_mref, atol=1e-5, rtol=1e-5)
    assert jnp.allclose(attn_m, attn_mref, atol=1e-5, rtol=1e-5)

    # --- per-batch (B, Lq, Lk) mask path ---
    mask_b = jnp.broadcast_to(causal, (B, Lq, Lk))
    out_b, attn_b = scaled_dot_product_attention(q, k, v, temperature, mask=mask_b)
    out_b = jax.block_until_ready(out_b)
    attn_b = jax.block_until_ready(attn_b)
    assert jnp.allclose(out_b, out_mref, atol=1e-5, rtol=1e-5)
    assert jnp.allclose(attn_b, attn_mref, atol=1e-5, rtol=1e-5)

    print("KERNEL_OK")
</pallas_src>

<mosaic_0001>
module attributes {stable_mosaic.version = 11 : i64} {
  func.func @_sdpa_kernel_nomask(%arg0: i32, %arg1: i32, %arg2: memref<2x8x32xf32, #tpu.memory_space<vmem>>, %arg3: memref<2x8x32xf32, #tpu.memory_space<vmem>>, %arg4: memref<2x8x32xf32, #tpu.memory_space<vmem>>, %arg5: memref<2x8x32xf32, #tpu.memory_space<vmem>>, %arg6: memref<2x8x8xf32, #tpu.memory_space<vmem>>) attributes {dimension_semantics = [#tpu.dimension_semantics<arbitrary>, #tpu.dimension_semantics<parallel>], iteration_bounds = array<i64: 1, 1>, scalar_prefetch = 0 : i64, scratch_operands = 0 : i64, tpu.core_type = #tpu.core_type<tc>, window_params = [{transform_indices = @transform_0, window_bounds = array<i64: 2, 8, 32>}, {transform_indices = @transform_1, window_bounds = array<i64: 2, 8, 32>}, {transform_indices = @transform_2, window_bounds = array<i64: 2, 8, 32>}, {transform_indices = @transform_3, window_bounds = array<i64: 2, 8, 32>}, {transform_indices = @transform_4, window_bounds = array<i64: 2, 8, 8>}]} {
    %c0 = arith.constant 0 : index
    %c0_0 = arith.constant 0 : index
    %c0_1 = arith.constant 0 : index
    %0 = vector.load %arg2[%c0, %c0_0, %c0_1] : memref<2x8x32xf32, #tpu.memory_space<vmem>>, vector<2x8x32xf32>
    %cst = arith.constant 0.176776692 : f32
    %1 = vector.broadcast %cst : f32 to vector<2x8x32xf32>
    %2 = arith.mulf %0, %1 : vector<2x8x32xf32>
    %c0_2 = arith.constant 0 : index
    %c0_3 = arith.constant 0 : index
    %c0_4 = arith.constant 0 : index
    %3 = vector.load %arg3[%c0_2, %c0_3, %c0_4] : memref<2x8x32xf32, #tpu.memory_space<vmem>>, vector<2x8x32xf32>
    %c0_5 = arith.constant 0 : index
    %c0_6 = arith.constant 0 : index
    %c0_7 = arith.constant 0 : index
    %4 = vector.load %arg4[%c0_5, %c0_6, %c0_7] : memref<2x8x32xf32, #tpu.memory_space<vmem>>, vector<2x8x32xf32>
    "tpu.trace_start"() <{level = 10 : i32, message = "bqd,bkd->bqk"}> : () -> ()
    %cst_8 = arith.constant dense<0.000000e+00> : vector<2x8x8xf32>
    %5 = tpu.matmul %2, %3, %cst_8 {dimension_numbers = #tpu.dot_dimension_numbers<[2], [2], [1], [1], [0, 0, 0, 1, 1, 1], [0], [0]>} : vector<2x8x32xf32>, vector<2x8x32xf32>, vector<2x8x8xf32> -> vector<2x8x8xf32>
    "tpu.trace_stop"() : () -> ()
    %cst_9 = arith.constant dense<0xFF800000> : vector<2x8xf32>
    %6 = vector.multi_reduction <maximumf>, %5, %cst_9 [2] : vector<2x8x8xf32> to vector<2x8xf32>
    %7 = vector.shape_cast %6 : vector<2x8xf32> to vector<2x8x1xf32>
    %8 = vector.broadcast %7 : vector<2x8x1xf32> to vector<2x8x8xf32>
    %9 = arith.subf %5, %8 : vector<2x8x8xf32>
    %10 = math.exp %9 : vector<2x8x8xf32>
    %cst_10 = arith.constant dense<0.000000e+00> : vector<2x8xf32>
    %11 = vector.multi_reduction <add>, %10, %cst_10 [2] : vector<2x8x8xf32> to vector<2x8xf32>
    %12 = vector.shape_cast %11 : vector<2x8xf32> to vector<2x8x1xf32>
    %13 = tpu.reciprocal %12 : vector<2x8x1xf32> -> vector<2x8x1xf32>
    %14 = vector.broadcast %13 : vector<2x8x1xf32> to vector<2x8x8xf32>
    %15 = arith.mulf %10, %14 : vector<2x8x8xf32>
    %c0_11 = arith.constant 0 : index
    %c0_12 = arith.constant 0 : index
    %c0_13 = arith.constant 0 : index
    %16 = vector.load %arg6[%c0_11, %c0_12, %c0_13] : memref<2x8x8xf32, #tpu.memory_space<vmem>>, vector<2x8x8xf32>
    tpu.vector_store %arg6[%c0_11, %c0_12, %c0_13], %15 {strides = array<i32>} : memref<2x8x8xf32, #tpu.memory_space<vmem>>, vector<2x8x8xf32>,
    "tpu.trace_start"() <{level = 10 : i32, message = "bqk,bkd->bqd"}> : () -> ()
    %cst_14 = arith.constant dense<0.000000e+00> : vector<2x8x32xf32>
    %17 = tpu.matmul %15, %4, %cst_14 {dimension_numbers = #tpu.dot_dimension_numbers<[2], [1], [1], [2], [0, 0, 0, 1, 1, 2], [0], [0]>} : vector<2x8x8xf32>, vector<2x8x32xf32>, vector<2x8x32xf32> -> vector<2x8x32xf32>
    "tpu.trace_stop"() : () -> ()
    %c0_15 = arith.constant 0 : index
    %c0_16 = arith.constant 0 : index
    %c0_17 = arith.constant 0 : index
    %18 = vector.load %arg5[%c0_15, %c0_16, %c0_17] : memref<2x8x32xf32, #tpu.memory_space<vmem>>, vector<2x8x32xf32>
    tpu.vector_store %arg5[%c0_15, %c0_16, %c0_17], %17 {strides = array<i32>} : memref<2x8x32xf32, #tpu.memory_space<vmem>>, vector<2x8x32xf32>,
    return
  }
  func.func @transform_0(%arg0: i32, %arg1: i32) -> (i32, i32, i32) {
    %c0_i32 = arith.constant 0 : i32
    %c0_i32_0 = arith.constant 0 : i32
    return %arg0, %arg1, %c0_i32 : i32, i32, i32
  }
  func.func @transform_1(%arg0: i32, %arg1: i32) -> (i32, i32, i32) {
    %c0_i32 = arith.constant 0 : i32
    %c0_i32_0 = arith.constant 0 : i32
    %c0_i32_1 = arith.constant 0 : i32
    return %arg0, %c0_i32, %c0_i32_0 : i32, i32, i32
  }
  func.func @transform_2(%arg0: i32, %arg1: i32) -> (i32, i32, i32) {
    %c0_i32 = arith.constant 0 : i32
    %c0_i32_0 = arith.constant 0 : i32
    %c0_i32_1 = arith.constant 0 : i32
    return %arg0, %c0_i32, %c0_i32_0 : i32, i32, i32
  }
  func.func @transform_3(%arg0: i32, %arg1: i32) -> (i32, i32, i32) {
    %c0_i32 = arith.constant 0 : i32
    %c0_i32_0 = arith.constant 0 : i32
    return %arg0, %arg1, %c0_i32 : i32, i32, i32
  }
  func.func @transform_4(%arg0: i32, %arg1: i32) -> (i32, i32, i32) {
    %c0_i32 = arith.constant 0 : i32
    %c0_i32_0 = arith.constant 0 : i32
    return %arg0, %arg1, %c0_i32 : i32, i32, i32
  }
}

</mosaic_0001>

<llo_original>
// kernel: tpu_custom_call.1
$region0: #{tpu_custom_call.1}
  #allocation0 [shape = 'u32[]', space=smem, size = 0x4, offset = 0x4, fixed_abs, tag = 'smem constant byte address 0x4 - core index']
  #allocation1 [shape = 'u32[144,128]{1,0:T(1,128)}', space=vmem, size = 0x12000, scoped, tag = 'internal scratch']
  %s0 = inlined_call_operand.hbm [shape: f32[2,8,32], index: 0, kind: input, shape index: {}]
  %s1 = inlined_call_operand.hbm [shape: f32[2,8,32], index: 1, kind: input, shape index: {}]
  %s2 = inlined_call_operand.hbm [shape: f32[2,8,32], index: 2, kind: input, shape index: {}]
  %s3 = inlined_call_operand.hbm [shape: f32[2,8,32], index: 3, kind: output, shape index: {0}]
  %s4 = inlined_call_operand.hbm [shape: f32[2,8,8], index: 4, kind: output, shape index: {1}]
  %5 = xla_tuple %s3, %s4
  %s6 = sld [smem:[#allocation0]]
  $region42: #{tpu_custom_call.1} parent=0
    _
  %s8 = ssub.s32 1, %s6
  %s9 = scalar_select 0, %s8, %s6
  $region1: #{tpu_custom_call.1} parent=0
    #allocation2 [shape = 'u8[8192]{0}', space=vmem, size = 0x2000, scoped, tag = 'input window, operand 0, single buffered']
    #allocation3 [shape = 's32[1]{0}', space=sflag, size = 0x4, scoped, tag = 'scoped memory for tpu_custom_call.1']
    #allocation4 [shape = 's32[1]{0}', space=sflag, size = 0x4, scoped, tag = 'scoped memory for tpu_custom_call.1']
    #allocation5 [shape = 'u8[8192]{0}', space=vmem, size = 0x2000, scoped, tag = 'input window, operand 1, single buffered']
    #allocation6 [shape = 's32[1]{0}', space=sflag, size = 0x4, scoped, tag = 'scoped memory for tpu_custom_call.1']
    #allocation7 [shape = 'u8[8192]{0}', space=vmem, size = 0x2000, scoped, tag = 'input window, operand 2, single buffered']
    #allocation8 [shape = 'u8[8192]{0}', space=vmem, size = 0x2000, scoped, tag = 'output window, operand 0, single buffered']
    #allocation9 [shape = 'u8[8192]{0}', space=vmem, size = 0x2000, scoped, tag = 'output window, operand 1, single buffered']
    #allocation10 [shape = 's32[1]{0}', space=sflag, size = 0x4, scoped, tag = 'scoped memory for tpu_custom_call.1']
    %10 = vsyncpa [#allocation3], 0
    %11 = vsyncpa [#allocation6], 0
    %12 = vsyncpa [#allocation4], 0
    %13 = vsyncpa [#allocation10], 0
    // Predicated region
    $region2: #{tpu_custom_call.1} parent=1 // pred_check
      _
    $region3: #{tpu_custom_call.1} parent=1 // pred_check_branch
      %15 = sbr.rel (0) target = $region5
    $region4: #{tpu_custom_call.1} parent=1 // pred_region
      %s17 = ssub.s32 256, 256
      %18 = vsyncadd [#allocation3], %s17
      %s19 = sshll.u32 [#allocation2], 4
      %s20 = int_to_ptr.vmem [resolvable:$true] %s19
      %25 = dma.hbm_to_vmem [thread:$0]  %s0, 256, %s20, [#allocation3], 128, 128, 8
    $region5: #{tpu_custom_call.1} parent=1 // pred_fallthru
      _
    // Predicated region
    $region6: #{tpu_custom_call.1} parent=1 // pred_check
      _
    $region7: #{tpu_custom_call.1} parent=1 // pred_check_branch
      %27 = sbr.rel (0) target = $region9
    $region8: #{tpu_custom_call.1} parent=1 // pred_region
      %s29 = ssub.s32 256, 256
      %30 = vsyncadd [#allocation6], %s29
      %s31 = sshll.u32 [#allocation5], 4
      %s32 = int_to_ptr.vmem [resolvable:$true] %s31
      %37 = dma.hbm_to_vmem [thread:$0]  %s1, 256, %s32, [#allocation6], 128, 128, 8
    $region9: #{tpu_custom_call.1} parent=1 // pred_fallthru
      _
    // Predicated region
    $region10: #{tpu_custom_call.1} parent=1 // pred_check
      _
    $region11: #{tpu_custom_call.1} parent=1 // pred_check_branch
      %39 = sbr.rel (0) target = $region13
    $region12: #{tpu_custom_call.1} parent=1 // pred_region
      %s41 = ssub.s32 256, 256
      %42 = vsyncadd [#allocation6], %s41
      %s43 = sshll.u32 [#allocation7], 4
      %s44 = int_to_ptr.vmem [resolvable:$true] %s43
      %49 = dma.hbm_to_vmem [thread:$0]  %s2, 256, %s44, [#allocation6], 128, 128, 8
    $region13: #{tpu_custom_call.1} parent=1 // pred_fallthru
      _
    // Predicated region
    $region14: #{tpu_custom_call.1} parent=1 // pred_check
      _
    $region15: #{tpu_custom_call.1} parent=1 // pred_check_branch
      %51 = sbr.rel (0) target = $region17
    $region16: #{tpu_custom_call.1} parent=1 // pred_region
      %52 = dma.done [#allocation3], 256
    $region17: #{tpu_custom_call.1} parent=1 // pred_fallthru
      _
    // Predicated region
    $region18: #{tpu_custom_call.1} parent=1 // pred_check
      _
    $region19: #{tpu_custom_call.1} parent=1 // pred_check_branch
      %54 = sbr.rel (0) target = $region21
    $region20: #{tpu_custom_call.1} parent=1 // pred_region
      %55 = dma.done [#allocation6], 256
    $region21: #{tpu_custom_call.1} parent=1 // pred_fallthru
      _
    // Predicated region
    $region22: #{tpu_custom_call.1} parent=1 // pred_check
      _
    $region23: #{tpu_custom_call.1} parent=1 // pred_check_branch
      %57 = sbr.rel (0) target = $region25
    $region24: #{tpu_custom_call.1} parent=1 // pred_region
      %58 = dma.done [#allocation6], 256
    $region25: #{tpu_custom_call.1} parent=1 // pred_fallthru
      _
    %v59 = vld [vmem:[#allocation2] sm:$0xff]
    %v60 = vld [vmem:[#allocation2 + $0x8] sm:$0xff]
    %v61 = vmul.f32 %v59, 0.17677669
    %v62 = vmul.f32 %v60, 0.17677669
    %v63 = vld [vmem:[#allocation5] sm:$0xff]
    %v64 = vld [vmem:[#allocation5 + $0x8] sm:$0xff]
    %v65 = vld [vmem:[#allocation7] sm:$0xff]
    %v66 = vld [vmem:[#allocation7 + $0x8] sm:$0xff]
    %vm67 = vcmask 261120
    %v69 = vsel %vm67, %v61, 0
    %v72 = vsel %vm67, %v63, 0
    %74 = vmatprep.subr.mxu0 0.0
    %75 = vmatpush1.xpose.msra.mxu0 %v72
    %76 = vmatprep.subr.mxu0 0.0
    %77 = vmatpush1.xpose.msra.mxu0 0.0
    %78 = vmatprep.subr.mxu0 0.0
    %79 = vmatpush1.xpose.msra.mxu0 0.0
    %80 = vmatprep.subr.mxu0 0.0
    %81 = vmatpush1.xpose.msra.mxu0 0.0
    %82 = vmatprep.subr.mxu0 0.0
    %83 = vmatpush1.xpose.msra.mxu0 0.0
    %84 = vmatprep.subr.mxu0 0.0
    %85 = vmatpush1.xpose.msra.mxu0 0.0
    %86 = vmatprep.subr.mxu0 0.0
    %87 = vmatpush1.xpose.msra.mxu0 0.0
    %88 = vmatprep.subr.mxu0 0.0
    %89 = vmatpush1.xpose.msra.mxu0 0.0
    %90 = vmatprep.subr.mxu0 0.0
    %91 = vmatpush1.xpose.msra.mxu0 0.0
    %92 = vmatprep.subr.mxu0 0.0
    %93 = vmatpush1.xpose.msra.mxu0 0.0
    %94 = vmatprep.subr.mxu0 0.0
    %95 = vmatpush1.xpose.msra.mxu0 0.0
    %96 = vmatprep.subr.mxu0 0.0
    %97 = vmatpush1.xpose.msra.mxu0 0.0
    %98 = vmatprep.subr.mxu0 0.0
    %99 = vmatpush1.xpose.msra.mxu0 0.0
    %100 = vmatprep.subr.mxu0 0.0
    %101 = vmatpush1.xpose.msra.mxu0 0.0
    %102 = vmatprep.subr.mxu0 0.0
    %103 = vmatpush1.xpose.msra.mxu0 0.0
    %104 = vmatprep.subr.mxu0 0.0
    %105 = vmatpush1.xpose.msra.mxu0 0.0
    %106 = vmatprep.subr.mxu0 0.0
    %107 = vmatpush1.xpose.msra.mxu0 0.0
    %108 = vmatprep.subr.mxu0 0.0
    %109 = vmatpush1.xpose.msra.mxu0 0.0
    %110 = vmatprep.subr.mxu0 0.0
    %111 = vmatpush1.xpose.msra.mxu0 0.0
    %112 = vmatprep.subr.mxu0 0.0
    %113 = vmatpush1.xpose.msra.mxu0 0.0
    %114 = vmatprep.subr.mxu0 0.0
    %115 = vmatpush1.xpose.msra.mxu0 0.0
    %116 = vmatprep.subr.mxu0 0.0
    %117 = vmatpush1.xpose.msra.mxu0 0.0
    %118 = vmatprep.subr.mxu0 0.0
    %119 = vmatpush1.xpose.msra.mxu0 0.0
    %120 = vmatprep.subr.mxu0 0.0
    %121 = vmatpush1.xpose.msra.mxu0 0.0
    %122 = vmatprep.subr.mxu0 0.0
    %123 = vmatpush1.xpose.msra.mxu0 0.0
    %124 = vmatprep.subr.mxu0 0.0
    %125 = vmatpush1.xpose.msra.mxu0 0.0
    %126 = vmatprep.subr.mxu0 0.0
    %127 = vmatpush1.xpose.msra.mxu0 0.0
    %128 = vmatprep.subr.mxu0 0.0
    %129 = vmatpush1.xpose.msra.mxu0 0.0
    %130 = vmatprep.subr.mxu0 0.0
    %131 = vmatpush1.xpose.msra.mxu0 0.0
    %132 = vmatprep.subr.mxu0 0.0
    %133 = vmatpush1.xpose.msra.mxu0 0.0
    %134 = vmatprep.subr.mxu0 0.0
    %135 = vmatpush1.xpose.msra.mxu0 0.0
    %136 = vmatprep.subr.mxu0 0.0
    %137 = vmatpush1.xpose.msra.mxu0 0.0
    %138 = vmatprep.mubr.f32.mxu0 0.0
    %139 = vmatmul.mubr.f32.gmra.mrb[0].mxu0 %v69
    %v140 = vpop.f32.mrb[0].mxu0
    %v141 = vadd.f32 0.0, %v140
    %v142 = vpop.f32.mrb[0].mxu0
    %143 = vdwg.mxu0
    %v145 = vsel %vm67, %v62, 0
    %v148 = vsel %vm67, %v64, 0
    %150 = vmatprep.subr.mxu0 0.0
    %151 = vmatpush1.xpose.msra.mxu0 %v148
    %152 = vmatprep.subr.mxu0 0.0
    %153 = vmatpush1.xpose.msra.mxu0 0.0
    %154 = vmatprep.subr.mxu0 0.0
    %155 = vmatpush1.xpose.msra.mxu0 0.0
    %156 = vmatprep.subr.mxu0 0.0
    %157 = vmatpush1.xpose.msra.mxu0 0.0
    %158 = vmatprep.subr.mxu0 0.0
    %159 = vmatpush1.xpose.msra.mxu0 0.0
    %160 = vmatprep.subr.mxu0 0.0
    %161 = vmatpush1.xpose.msra.mxu0 0.0
    %162 = vmatprep.subr.mxu0 0.0
    %163 = vmatpush1.xpose.msra.mxu0 0.0
    %164 = vmatprep.subr.mxu0 0.0
    %165 = vmatpush1.xpose.msra.mxu0 0.0
    %166 = vmatprep.subr.mxu0 0.0
    %167 = vmatpush1.xpose.msra.mxu0 0.0
    %168 = vmatprep.subr.mxu0 0.0
    %169 = vmatpush1.xpose.msra.mxu0 0.0
    %170 = vmatprep.subr.mxu0 0.0
    %171 = vmatpush1.xpose.msra.mxu0 0.0
    %172 = vmatprep.subr.mxu0 0.0
    %173 = vmatpush1.xpose.msra.mxu0 0.0
    %174 = vmatprep.subr.mxu0 0.0
    %175 = vmatpush1.xpose.msra.mxu0 0.0
    %176 = vmatprep.subr.mxu0 0.0
    %177 = vmatpush1.xpose.msra.mxu0 0.0
    %178 = vmatprep.subr.mxu0 0.0
    %179 = vmatpush1.xpose.msra.mxu0 0.0
    %180 = vmatprep.subr.mxu0 0.0
    %181 = vmatpush1.xpose.msra.mxu0 0.0
    %182 = vmatprep.subr.mxu0 0.0
    %183 = vmatpush1.xpose.msra.mxu0 0.0
    %184 = vmatprep.subr.mxu0 0.0
    %185 = vmatpush1.xpose.msra.mxu0 0.0
    %186 = vmatprep.subr.mxu0 0.0
    %187 = vmatpush1.xpose.msra.mxu0 0.0
    %188 = vmatprep.subr.mxu0 0.0
    %189 = vmatpush1.xpose.msra.mxu0 0.0
    %190 = vmatprep.subr.mxu0 0.0
    %191 = vmatpush1.xpose.msra.mxu0 0.0
    %192 = vmatprep.subr.mxu0 0.0
    %193 = vmatpush1.xpose.msra.mxu0 0.0
    %194 = vmatprep.subr.mxu0 0.0
    %195 = vmatpush1.xpose.msra.mxu0 0.0
    %196 = vmatprep.subr.mxu0 0.0
    %197 = vmatpush1.xpose.msra.mxu0 0.0
    %198 = vmatprep.subr.mxu0 0.0
    %199 = vmatpush1.xpose.msra.mxu0 0.0
    %200 = vmatprep.subr.mxu0 0.0
    %201 = vmatpush1.xpose.msra.mxu0 0.0
    %202 = vmatprep.subr.mxu0 0.0
    %203 = vmatpush1.xpose.msra.mxu0 0.0
    %204 = vmatprep.subr.mxu0 0.0
    %205 = vmatpush1.xpose.msra.mxu0 0.0
    %206 = vmatprep.subr.mxu0 0.0
    %207 = vmatpush1.xpose.msra.mxu0 0.0
    %208 = vmatprep.subr.mxu0 0.0
    %209 = vmatpush1.xpose.msra.mxu0 0.0
    %210 = vmatprep.subr.mxu0 0.0
    %211 = vmatpush1.xpose.msra.mxu0 0.0
    %212 = vmatprep.subr.mxu0 0.0
    %213 = vmatpush1.xpose.msra.mxu0 0.0
    %214 = vmatprep.mubr.f32.mxu0 0.0
    %215 = vmatmul.mubr.f32.gmra.mrb[0].mxu0 %v145
    %v216 = vpop.f32.mrb[0].mxu0
    %v217 = vadd.f32 0.0, %v216
    %v218 = vpop.f32.mrb[0].mxu0
    %219 = vdwg.mxu0
    %vm220 = vcmask 64512
    %v221 = vsel %vm220, %v141, -inf
    %222 = vmax.xlane.f32.xlu0 %v221
    %v223 = vpop.xlane.xlu0 %222
    %v224 = vsel %vm220, %v217, -inf
    %225 = vmax.xlane.f32.xlu0 %v224
    %v226 = vpop.xlane.xlu0 %225
    %v227 = vsub.f32 %v141, %v223
    %v228 = vsub.f32 %v217, %v226
    %v229 = vmul.f32 %v227, 1.442695
    %v230 = vpow.pop %v229
    %v231 = vmul.f32 %v228, 1.442695
    %v232 = vpow.pop %v231
    %v233 = vsel %vm220, %v230, 0.0
    %234 = vadd.xlane.f32.xlu0 %v233
    %v235 = vpop.xlane.xlu0 %234
    %v236 = vsel %vm220, %v232, 0.0
    %237 = vadd.xlane.f32.xlu0 %v236
    %v238 = vpop.xlane.xlu0 %237
    %v239 = vrcp.pop %v235
    %v240 = vrcp.pop %v238
    %v241 = vmul.f32 %v230, %v239
    %v242 = vmul.f32 %v232, %v240
    %243 = vst.msk [vmem:[#allocation9] sm:$0xff] %vm220, %v241
    %244 = vst.msk [vmem:[#allocation9 + $0x8] sm:$0xff] %vm220, %v242
    %v246 = vsel %vm220, %v241, 0
    %248 = vmatprep.subr.mxu0 0.0
    %249 = vmatpush1.msra.mxu0 %v65
    %250 = vmatprep.subr.mxu0 0.0
    %251 = vmatpush1.msra.mxu0 0.0
    %252 = vmatprep.subr.mxu0 0.0
    %253 = vmatpush1.msra.mxu0 0.0
    %254 = vmatprep.subr.mxu0 0.0
    %255 = vmatpush1.msra.mxu0 0.0
    %256 = vmatprep.subr.mxu0 0.0
    %257 = vmatpush1.msra.mxu0 0.0
    %258 = vmatprep.subr.mxu0 0.0
    %259 = vmatpush1.msra.mxu0 0.0
    %260 = vmatprep.subr.mxu0 0.0
    %261 = vmatpush1.msra.mxu0 0.0
    %262 = vmatprep.subr.mxu0 0.0
    %263 = vmatpush1.msra.mxu0 0.0
    %264 = vmatprep.subr.mxu0 0.0
    %265 = vmatpush1.msra.mxu0 0.0
    %266 = vmatprep.subr.mxu0 0.0
    %267 = vmatpush1.msra.mxu0 0.0
    %268 = vmatprep.subr.mxu0 0.0
    %269 = vmatpush1.msra.mxu0 0.0
    %270 = vmatprep.subr.mxu0 0.0
    %271 = vmatpush1.msra.mxu0 0.0
    %272 = vmatprep.subr.mxu0 0.0
    %273 = vmatpush1.msra.mxu0 0.0
    %274 = vmatprep.subr.mxu0 0.0
    %275 = vmatpush1.msra.mxu0 0.0
    %276 = vmatprep.subr.mxu0 0.0
    %277 = vmatpush1.msra.mxu0 0.0
    %278 = vmatprep.subr.mxu0 0.0
    %279 = vmatpush1.msra.mxu0 0.0
    %280 = vmatprep.subr.mxu0 0.0
    %281 = vmatpush1.msra.mxu0 0.0
    %282 = vmatprep.subr.mxu0 0.0
    %283 = vmatpush1.msra.mxu0 0.0
    %284 = vmatprep.subr.mxu0 0.0
    %285 = vmatpush1.msra.mxu0 0.0
    %286 = vmatprep.subr.mxu0 0.0
    %287 = vmatpush1.msra.mxu0 0.0
    %288 = vmatprep.subr.mxu0 0.0
    %289 = vmatpush1.msra.mxu0 0.0
    %290 = vmatprep.subr.mxu0 0.0
    %291 = vmatpush1.msra.mxu0 0.0
    %292 = vmatprep.subr.mxu0 0.0
    %293 = vmatpush1.msra.mxu0 0.0
    %294 = vmatprep.subr.mxu0 0.0
    %295 = vmatpush1.msra.mxu0 0.0
    %296 = vmatprep.subr.mxu0 0.0
    %297 = vmatpush1.msra.mxu0 0.0
    %298 = vmatprep.subr.mxu0 0.0
    %299 = vmatpush1.msra.mxu0 0.0
    %300 = vmatprep.subr.mxu0 0.0
    %301 = vmatpush1.msra.mxu0 0.0
    %302 = vmatprep.subr.mxu0 0.0
    %303 = vmatpush1.msra.mxu0 0.0
    %304 = vmatprep.subr.mxu0 0.0
    %305 = vmatpush1.msra.mxu0 0.0
    %306 = vmatprep.subr.mxu0 0.0
    %307 = vmatpush1.msra.mxu0 0.0
    %308 = vmatprep.subr.mxu0 0.0
    %309 = vmatpush1.msra.mxu0 0.0
    %310 = vmatprep.subr.mxu0 0.0
    %311 = vmatpush1.msra.mxu0 0.0
    %312 = vmatprep.mubr.f32.mxu0 0.0
    %313 = vmatmul.mubr.f32.gmra.mrb[0].mxu0 %v246
    %v314 = vpop.f32.mrb[0].mxu0
    %v315 = vadd.f32 0.0, %v314
    %v316 = vpop.f32.mrb[0].mxu0
    %317 = vdwg.mxu0
    %v319 = vsel %vm220, %v242, 0
    %321 = vmatprep.subr.mxu0 0.0
    %322 = vmatpush1.msra.mxu0 %v66
    %323 = vmatprep.subr.mxu0 0.0
    %324 = vmatpush1.msra.mxu0 0.0
    %325 = vmatprep.subr.mxu0 0.0
    %326 = vmatpush1.msra.mxu0 0.0
    %327 = vmatprep.subr.mxu0 0.0
    %328 = vmatpush1.msra.mxu0 0.0
    %329 = vmatprep.subr.mxu0 0.0
    %330 = vmatpush1.msra.mxu0 0.0
    %331 = vmatprep.subr.mxu0 0.0
    %332 = vmatpush1.msra.mxu0 0.0
    %333 = vmatprep.subr.mxu0 0.0
    %334 = vmatpush1.msra.mxu0 0.0
    %335 = vmatprep.subr.mxu0 0.0
    %336 = vmatpush1.msra.mxu0 0.0
    %337 = vmatprep.subr.mxu0 0.0
    %338 = vmatpush1.msra.mxu0 0.0
    %339 = vmatprep.subr.mxu0 0.0
    %340 = vmatpush1.msra.mxu0 0.0
    %341 = vmatprep.subr.mxu0 0.0
    %342 = vmatpush1.msra.mxu0 0.0
    %343 = vmatprep.subr.mxu0 0.0
    %344 = vmatpush1.msra.mxu0 0.0
    %345 = vmatprep.subr.mxu0 0.0
    %346 = vmatpush1.msra.mxu0 0.0
    %347 = vmatprep.subr.mxu0 0.0
    %348 = vmatpush1.msra.mxu0 0.0
    %349 = vmatprep.subr.mxu0 0.0
    %350 = vmatpush1.msra.mxu0 0.0
    %351 = vmatprep.subr.mxu0 0.0
    %352 = vmatpush1.msra.mxu0 0.0
    %353 = vmatprep.subr.mxu0 0.0
    %354 = vmatpush1.msra.mxu0 0.0
    %355 = vmatprep.subr.mxu0 0.0
    %356 = vmatpush1.msra.mxu0 0.0
    %357 = vmatprep.subr.mxu0 0.0
    %358 = vmatpush1.msra.mxu0 0.0
    %359 = vmatprep.subr.mxu0 0.0
    %360 = vmatpush1.msra.mxu0 0.0
    %361 = vmatprep.subr.mxu0 0.0
    %362 = vmatpush1.msra.mxu0 0.0
    %363 = vmatprep.subr.mxu0 0.0
    %364 = vmatpush1.msra.mxu0 0.0
    %365 = vmatprep.subr.mxu0 0.0
    %366 = vmatpush1.msra.mxu0 0.0
    %367 = vmatprep.subr.mxu0 0.0
    %368 = vmatpush1.msra.mxu0 0.0
    %369 = vmatprep.subr.mxu0 0.0
    %370 = vmatpush1.msra.mxu0 0.0
    %371 = vmatprep.subr.mxu0 0.0
    %372 = vmatpush1.msra.mxu0 0.0
    %373 = vmatprep.subr.mxu0 0.0
    %374 = vmatpush1.msra.mxu0 0.0
    %375 = vmatprep.subr.mxu0 0.0
    %376 = vmatpush1.msra.mxu0 0.0
    %377 = vmatprep.subr.mxu0 0.0
    %378 = vmatpush1.msra.mxu0 0.0
    %379 = vmatprep.subr.mxu0 0.0
    %380 = vmatpush1.msra.mxu0 0.0
    %381 = vmatprep.subr.mxu0 0.0
    %382 = vmatpush1.msra.mxu0 0.0
    %383 = vmatprep.subr.mxu0 0.0
    %384 = vmatpush1.msra.mxu0 0.0
    %385 = vmatprep.mubr.f32.mxu0 0.0
    %386 = vmatmul.mubr.f32.gmra.mrb[0].mxu0 %v319
    %v387 = vpop.f32.mrb[0].mxu0
    %v388 = vadd.f32 0.0, %v387
    %v389 = vpop.f32.mrb[0].mxu0
    %390 = vdwg.mxu0
    %391 = vst.msk [vmem:[#allocation8] sm:$0xff] %vm67, %v315
    %392 = vst.msk [vmem:[#allocation8 + $0x8] sm:$0xff] %vm67, %v388
    // Predicated region
    $region26: #{tpu_custom_call.1} parent=1 // pred_check
      _
    $region27: #{tpu_custom_call.1} parent=1 // pred_check_branch
      %394 = sbr.rel (0) target = $region29
    $region28: #{tpu_custom_call.1} parent=1 // pred_region
      %s396 = ssub.s32 256, 256
      %397 = vsyncadd [#allocation4], %s396
      %s398 = sshll.u32 [#allocation8], 4
      %s399 = int_to_ptr.vmem [resolvable:$true] %s398
      %404 = dma.vmem_to_hbm [thread:$0]  %s399, 256, %s3, [#allocation4], 128, 128, 8
    $region29: #{tpu_custom_call.1} parent=1 // pred_fallthru
      _
    // Predicated region
    $region30: #{tpu_custom_call.1} parent=1 // pred_check
      _
    $region31: #{tpu_custom_call.1} parent=1 // pred_check_branch
      %406 = sbr.rel (0) target = $region33
    $region32: #{tpu_custom_call.1} parent=1 // pred_region
      %s408 = ssub.s32 256, 256
      %409 = vsyncadd [#allocation10], %s408
      %s410 = sshll.u32 [#allocation9], 4
      %s411 = int_to_ptr.vmem [resolvable:$true] %s410
      %416 = dma.vmem_to_hbm [thread:$0]  %s411, 256, %s4, [#allocation10], 128, 128, 8
    $region33: #{tpu_custom_call.1} parent=1 // pred_fallthru
      _
    // Predicated region
    $region34: #{tpu_custom_call.1} parent=1 // pred_check
      _
    $region35: #{tpu_custom_call.1} parent=1 // pred_check_branch
      %418 = sbr.rel (0) target = $region37
    $region36: #{tpu_custom_call.1} parent=1 // pred_region
      %419 = dma.done [#allocation4], 256
    $region37: #{tpu_custom_call.1} parent=1 // pred_fallthru
      _
    // Predicated region
    $region38: #{tpu_custom_call.1} parent=1 // pred_check
      _
    $region39: #{tpu_custom_call.1} parent=1 // pred_check_branch
      %421 = sbr.rel (0) target = $region41
    $region40: #{tpu_custom_call.1} parent=1 // pred_region
      %422 = dma.done [#allocation10], 256
    $region41: #{tpu_custom_call.1} parent=1 // pred_fallthru
      _
    %423 = vsyncpa [#allocation3], 1
    %424 = vsyncpa [#allocation6], 1
    %425 = vsyncpa [#allocation4], 1
    %426 = vsyncpa [#allocation10], 1

</llo_original>
